<compile_context>
chip_gen: v5e
topology: v5e:2x2
jax: 0.10.0
libtpu: 0.0.40
codegen_flags: <defaults>
</compile_context>

<pallas_src>
import math

import jax
import jax.numpy as jnp
from jax import lax
from jax.experimental import pallas as pl
from jax.experimental.pallas import tpu as pltpu


def _attention_adj_kernel(qk_ref, k_ref, v_ref, wq_ref, bq_ref, x_ref, attn_ref):
    """One (batch, q-tile) grid step.

    qk_ref  : (1, TQ, D) bf16  raw q-side input tile
    k_ref   : (1, L,  D) bf16  pre-projected keys   (full key length, resident per batch)
    v_ref   : (1, L,  D) bf16  pre-projected values (full key length, resident per batch)
    wq_ref  : (D, D)     bf16  Q projection weight, pre-scaled by 1/sqrt(D)
    bq_ref  : (1, D)     f32   Q projection bias,   pre-scaled by 1/sqrt(D)
    x_ref   : (1, TQ, D) f32   attention output tile
    attn_ref: (1, TQ, L) f32   pre-softmax scaled scores tile
    """
    # Q projection (MXU, bf16 operands, f32 accumulation). The 1/sqrt(D) scale
    # is already folded into wq/bq in the wrapper -> no extra multiply here.
    q = jnp.dot(qk_ref[0], wq_ref[...], preferred_element_type=jnp.float32)
    q = q + bq_ref[...]                                        # (TQ, D) f32

    # Scores: contract last dims directly (no k.T transpose / XLU relayout).
    scores = lax.dot_general(
        q.astype(jnp.bfloat16), k_ref[0],
        dimension_numbers=(((1,), (1,)), ((), ())),
        preferred_element_type=jnp.float32)                    # (TQ, L) f32
    attn_ref[0] = scores.astype(attn_ref.dtype)

    # Numerically stable softmax in f32; the reciprocal goes to the EUP slot.
    m = jnp.max(scores, axis=-1, keepdims=True)
    e = jnp.exp(scores - m)
    inv_l = pl.reciprocal(jnp.sum(e, axis=-1, keepdims=True), approx=True)
    p = e * inv_l                                              # (TQ, L) f32

    # Attention output: (TQ, D), bf16 operands, f32 accumulation.
    x = jnp.dot(p.astype(jnp.bfloat16), v_ref[0],
                preferred_element_type=jnp.float32)
    x_ref[0] = x.astype(x_ref.dtype)


def _vmem_limit_bytes():
    """~85% of this chip's physical VMEM (leave headroom for Mosaic scratch)."""
    cap = None
    try:
        cap = getattr(pltpu.get_tpu_info(), "vmem_capacity_bytes", None)
    except Exception:
        cap = None
    if not cap:
        cap = 64 * 1024 * 1024   # conservative floor: v7x per-TC VMEM
    return int(cap * 0.85)


def _pick_q_tile(L, D, *, vmem_budget_bytes, kv_buffers, target):
    """Largest MXU/sublane-aligned q tile that fits the VMEM budget.

    Budget accounts for: double-buffered qk / x / attn tiles, K and V residency
    (kv_buffers copies each), the (small) weight/bias blocks, and ~3x(TQ, L)
    f32 in-kernel intermediates (scores, e, p) plus the (TQ, D) f32 q.
    """
    # TQ-independent residency (bytes): K + V (bf16) and weight/bias blocks.
    fixed = kv_buffers * 2 * (L * D * 2) + 2 * (D * D * 2) + 2 * (D * 4)
    # Bytes per row of TQ:
    #   qk tile in   (bf16, x2 buffers)    : 2 * D * 2
    #   x tile out   (f32,  x2 buffers)    : 2 * D * 4
    #   attn tile out(f32,  x2 buffers)    : 2 * L * 4
    #   f32 intermediates (scores, e, p, q): 3 * L * 4 + 2 * D * 4
    per_row = 2 * D * 2 + 2 * D * 4 + 2 * L * 4 + 3 * L * 4 + 2 * D * 4
    avail = vmem_budget_bytes - fixed
    tq_max = max(8, avail // per_row) if avail > 0 else 8
    tq_max = int(min(tq_max, target, L))

    if tq_max >= L:
        return L
    # Prefer the largest aligned divisor of L: 256 (fills the 256-wide MXU
    # M-dim on v6e/v7x) > 128 (v5e MXU) > 16 (bf16 sublane packing) > 8.
    for align in (256, 128, 16, 8):
        t = (tq_max // align) * align
        while t >= align:
            if L % t == 0:
                return t
            t -= align
    # No aligned divisor fits: use the largest aligned non-divisor; the grid
    # uses pl.cdiv so the ragged last q tile is padded/clipped by Pallas.
    for align in (256, 128, 16, 8):
        if tq_max >= align:
            return (tq_max // align) * align
    return max(8, min(L, tq_max))


def attention_adj(qk, v, wq, bq, wk, bk, wv, bv, *, q_tile=1024,
                  attn_dtype=jnp.float32):
    """qk, v: (B, L, D) f32; wq/wk/wv: (D, D); bq/bk/bv: (1, D).

    Returns (x, attn) with x: (B, L, D) f32, attn: (B, L, L) `attn_dtype`
    (pre-softmax scaled scores), matching Attention_ADJ.forward.
    NOTE: real configs should keep D a multiple of 128 for lane-dense stores.
    """
    B, L, D = qk.shape
    inv_sqrt_d = 1.0 / math.sqrt(D)

    # Hoist K / V projections out of the per-q-tile loop: one plain XLA GEMM
    # each (single pass over qk / v), consumed by the kernel in bf16.
    k16 = (jnp.dot(qk, wk, preferred_element_type=jnp.float32) + bk).astype(jnp.bfloat16)
    v16 = (jnp.dot(v, wv, preferred_element_type=jnp.float32) + bv).astype(jnp.bfloat16)

    # Fold 1/sqrt(D) into the Q projection (commutes with q @ k^T) and move
    # matmul operands to bf16 (accumulation stays f32 inside the kernel).
    wq16 = (wq * inv_sqrt_d).astype(jnp.bfloat16)
    bq32 = (bq * inv_sqrt_d).astype(jnp.float32)
    qk16 = qk.astype(jnp.bfloat16)

    vmem_limit = _vmem_limit_bytes()
    vmem_budget = vmem_limit - 4 * 1024 * 1024   # extra slack for Mosaic scratch

    def _invoke(kv_buffer_count):
        tq = _pick_q_tile(L, D, vmem_budget_bytes=vmem_budget,
                          kv_buffers=kv_buffer_count, target=q_tile)
        nq = pl.cdiv(L, tq)

        qk_spec = pl.BlockSpec((1, tq, D), lambda b, qi: (b, qi, 0))
        if kv_buffer_count == 1:
            # K/V block index is constant across the qi axis -> single-buffer
            # the residency to free VMEM (one pipeline bubble per batch).
            kv_spec = pl.BlockSpec((1, L, D), lambda b, qi: (b, 0, 0),
                                   pipeline_mode=pl.Buffered(1))
        else:
            kv_spec = pl.BlockSpec((1, L, D), lambda b, qi: (b, 0, 0))
        wq_spec = pl.BlockSpec((D, D), lambda b, qi: (0, 0))
        bq_spec = pl.BlockSpec((1, D), lambda b, qi: (0, 0))

        out_shapes = (
            jax.ShapeDtypeStruct((B, L, D), jnp.float32),   # x
            jax.ShapeDtypeStruct((B, L, L), attn_dtype),    # attn (pre-softmax)
        )
        out_specs = (
            pl.BlockSpec((1, tq, D), lambda b, qi: (b, qi, 0)),
            pl.BlockSpec((1, tq, L), lambda b, qi: (b, qi, 0)),
        )

        # Advisory cost for XLA scheduling around the custom call (kernel only).
        flops = 2 * B * L * D * D + 4 * B * L * L * D
        bytes_accessed = (qk16.size * 2 + k16.size * 2 + v16.size * 2
                          + wq16.size * 2 + bq32.size * 4
                          + B * L * D * 4
                          + B * L * L * jnp.dtype(attn_dtype).itemsize)
        cost = pl.CostEstimate(flops=flops, transcendentals=B * L * L,
                               bytes_accessed=bytes_accessed)

        return pl.pallas_call(
            _attention_adj_kernel,
            out_shape=out_shapes,
            grid_spec=pltpu.PrefetchScalarGridSpec(
                num_scalar_prefetch=0,
                grid=(B, nq),
                in_specs=[qk_spec, kv_spec, kv_spec, wq_spec, bq_spec],
                out_specs=out_specs,
            ),
            compiler_params=pltpu.CompilerParams(
                dimension_semantics=("parallel", "parallel"),
                vmem_limit_bytes=vmem_limit,
            ),
            cost_estimate=cost,
        )(qk16, k16, v16, wq16, bq32)

    try:
        return _invoke(1)
    except Exception:
        # TODO(synk): pipeline_mode=pl.Buffered(1) (single-buffered resident
        # K/V) rejected by this jax/Mosaic build; retry with default buffering.
        return _invoke(2)


def _reference(qk, v, wq, bq, wk, bk, wv, bv):
    q = qk @ wq + bq
    k = qk @ wk + bk
    val = v @ wv + bv
    scores = jnp.einsum("bld,bmd->blm", q, k) / math.sqrt(qk.shape[-1])
    p = jax.nn.softmax(scores, axis=-1)
    return jnp.einsum("blm,bmd->bld", p, val), scores


if __name__ == "__main__":
    B, L, D = 2, 8, 32  # batch, seq, d_model

    key = jax.random.PRNGKey(0)
    ks = jax.random.split(key, 8)

    qk = jax.random.normal(ks[0], (B, L, D), dtype=jnp.float32)
    v = jax.random.normal(ks[1], (B, L, D), dtype=jnp.float32)

    # Deterministic parameter init (matches nn.Linear(d_model, d_model) shapes).
    scale = 1.0 / math.sqrt(D)
    wq = jax.random.uniform(ks[2], (D, D), jnp.float32, -scale, scale)
    wk = jax.random.uniform(ks[3], (D, D), jnp.float32, -scale, scale)
    wv = jax.random.uniform(ks[4], (D, D), jnp.float32, -scale, scale)
    bq = jax.random.uniform(ks[5], (1, D), jnp.float32, -scale, scale)
    bk = jax.random.uniform(ks[6], (1, D), jnp.float32, -scale, scale)
    bv = jax.random.uniform(ks[7], (1, D), jnp.float32, -scale, scale)

    x, attn = attention_adj(qk, v, wq, bq, wk, bk, wv, bv)
    jax.block_until_ready((x, attn))

    x_ref, attn_ref = _reference(qk, v, wq, bq, wk, bk, wv, bv)
    # bf16 matmul operands + approx reciprocal -> relaxed tolerance vs f32 ref.
    assert jnp.allclose(x, x_ref, atol=3e-2, rtol=3e-2), "x mismatch"
    assert jnp.allclose(attn, attn_ref, atol=3e-2, rtol=3e-2), "attn mismatch"

    print("KERNEL_OK")
</pallas_src>

<mosaic_0001>
module attributes {stable_mosaic.version = 11 : i64} {
  func.func @_attention_adj_kernel(%arg0: i32, %arg1: i32, %arg2: memref<1x8x32xbf16, #tpu.memory_space<vmem>>, %arg3: memref<1x8x32xbf16, #tpu.memory_space<vmem>>, %arg4: memref<1x8x32xbf16, #tpu.memory_space<vmem>>, %arg5: memref<32x32xbf16, #tpu.memory_space<vmem>>, %arg6: memref<1x32xf32, #tpu.memory_space<vmem>>, %arg7: memref<1x8x32xf32, #tpu.memory_space<vmem>>, %arg8: memref<1x8x8xf32, #tpu.memory_space<vmem>>) attributes {dimension_semantics = [#tpu.dimension_semantics<parallel>, #tpu.dimension_semantics<parallel>], iteration_bounds = array<i64: 2, 1>, scalar_prefetch = 0 : i64, scratch_operands = 0 : i64, tpu.core_type = #tpu.core_type<tc>, window_params = [{transform_indices = @transform_0, window_bounds = array<i64: 1, 8, 32>}, {pipeline_mode = #tpu.pipeline_mode<synchronous>, transform_indices = @transform_1, window_bounds = array<i64: 1, 8, 32>}, {pipeline_mode = #tpu.pipeline_mode<synchronous>, transform_indices = @transform_2, window_bounds = array<i64: 1, 8, 32>}, {pipeline_mode = #tpu.pipeline_mode<synchronous>, transform_indices = @transform_3, window_bounds = array<i64: 32, 32>}, {pipeline_mode = #tpu.pipeline_mode<synchronous>, transform_indices = @transform_4, window_bounds = array<i64: 1, 32>}, {transform_indices = @transform_5, window_bounds = array<i64: 1, 8, 32>}, {transform_indices = @transform_6, window_bounds = array<i64: 1, 8, 8>}]} {
    %c0 = arith.constant 0 : index
    %c0_0 = arith.constant 0 : index
    %c0_1 = arith.constant 0 : index
    %0 = vector.load %arg2[%c0, %c0_0, %c0_1] : memref<1x8x32xbf16, #tpu.memory_space<vmem>>, vector<1x8x32xbf16>
    %1 = vector.shape_cast %0 : vector<1x8x32xbf16> to vector<8x32xbf16>
    %c0_2 = arith.constant 0 : index
    %c0_3 = arith.constant 0 : index
    %2 = vector.load %arg5[%c0_2, %c0_3] : memref<32x32xbf16, #tpu.memory_space<vmem>>, vector<32x32xbf16>
    %cst = arith.constant dense<0.000000e+00> : vector<8x32xf32>
    %3 = tpu.matmul %1, %2, %cst {dimension_numbers = #tpu.dot_dimension_numbers<[1], [0], [0], [1], [0, 0, 1, 1], [], []>} : vector<8x32xbf16>, vector<32x32xbf16>, vector<8x32xf32> -> vector<8x32xf32>
    %c0_4 = arith.constant 0 : index
    %c0_5 = arith.constant 0 : index
    %4 = vector.load %arg6[%c0_4, %c0_5] : memref<1x32xf32, #tpu.memory_space<vmem>>, vector<1x32xf32>
    %5 = vector.broadcast %4 : vector<1x32xf32> to vector<8x32xf32>
    %6 = arith.addf %3, %5 : vector<8x32xf32>
    %7 = arith.truncf %6 : vector<8x32xf32> to vector<8x32xbf16>
    %c0_6 = arith.constant 0 : index
    %c0_7 = arith.constant 0 : index
    %c0_8 = arith.constant 0 : index
    %8 = vector.load %arg3[%c0_6, %c0_7, %c0_8] : memref<1x8x32xbf16, #tpu.memory_space<vmem>>, vector<1x8x32xbf16>
    %9 = vector.shape_cast %8 : vector<1x8x32xbf16> to vector<8x32xbf16>
    %cst_9 = arith.constant dense<0.000000e+00> : vector<8x8xf32>
    %10 = tpu.matmul %7, %9, %cst_9 {dimension_numbers = #tpu.dot_dimension_numbers<[1], [1], [0], [0], [0, 0, 1, 0], [], []>} : vector<8x32xbf16>, vector<8x32xbf16>, vector<8x8xf32> -> vector<8x8xf32>
    %c0_10 = arith.constant 0 : index
    %c0_11 = arith.constant 0 : index
    %c0_12 = arith.constant 0 : index
    %11 = vector.load %arg8[%c0_10, %c0_11, %c0_12] : memref<1x8x8xf32, #tpu.memory_space<vmem>>, vector<1x8x8xf32>
    %12 = vector.shape_cast %11 : vector<1x8x8xf32> to vector<8x8xf32>
    %13 = vector.shape_cast %10 : vector<8x8xf32> to vector<1x8x8xf32>
    tpu.vector_store %arg8[%c0_10, %c0_11, %c0_12], %13 {strides = array<i32>} : memref<1x8x8xf32, #tpu.memory_space<vmem>>, vector<1x8x8xf32>,
    %cst_13 = arith.constant dense<0xFF800000> : vector<8xf32>
    %14 = vector.multi_reduction <maximumf>, %10, %cst_13 [1] : vector<8x8xf32> to vector<8xf32>
    %15 = vector.shape_cast %14 : vector<8xf32> to vector<8x1xf32>
    %16 = vector.broadcast %15 : vector<8x1xf32> to vector<8x8xf32>
    %17 = arith.subf %10, %16 : vector<8x8xf32>
    %18 = math.exp %17 : vector<8x8xf32>
    %cst_14 = arith.constant dense<0.000000e+00> : vector<8xf32>
    %19 = vector.multi_reduction <add>, %18, %cst_14 [1] : vector<8x8xf32> to vector<8xf32>
    %20 = vector.shape_cast %19 : vector<8xf32> to vector<8x1xf32>
    %21 = tpu.reciprocal %20 {approx = true} : vector<8x1xf32> -> vector<8x1xf32>
    %22 = vector.broadcast %21 : vector<8x1xf32> to vector<8x8xf32>
    %23 = arith.mulf %18, %22 : vector<8x8xf32>
    %24 = arith.truncf %23 : vector<8x8xf32> to vector<8x8xbf16>
    %c0_15 = arith.constant 0 : index
    %c0_16 = arith.constant 0 : index
    %c0_17 = arith.constant 0 : index
    %25 = vector.load %arg4[%c0_15, %c0_16, %c0_17] : memref<1x8x32xbf16, #tpu.memory_space<vmem>>, vector<1x8x32xbf16>
    %26 = vector.shape_cast %25 : vector<1x8x32xbf16> to vector<8x32xbf16>
    %cst_18 = arith.constant dense<0.000000e+00> : vector<8x32xf32>
    %27 = tpu.matmul %24, %26, %cst_18 {dimension_numbers = #tpu.dot_dimension_numbers<[1], [0], [0], [1], [0, 0, 1, 1], [], []>} : vector<8x8xbf16>, vector<8x32xbf16>, vector<8x32xf32> -> vector<8x32xf32>
    %c0_19 = arith.constant 0 : index
    %c0_20 = arith.constant 0 : index
    %c0_21 = arith.constant 0 : index
    %28 = vector.load %arg7[%c0_19, %c0_20, %c0_21] : memref<1x8x32xf32, #tpu.memory_space<vmem>>, vector<1x8x32xf32>
    %29 = vector.shape_cast %28 : vector<1x8x32xf32> to vector<8x32xf32>
    %30 = vector.shape_cast %27 : vector<8x32xf32> to vector<1x8x32xf32>
    tpu.vector_store %arg7[%c0_19, %c0_20, %c0_21], %30 {strides = array<i32>} : memref<1x8x32xf32, #tpu.memory_space<vmem>>, vector<1x8x32xf32>,
    return
  }
  func.func @transform_0(%arg0: i32, %arg1: i32) -> (i32, i32, i32) {
    %c0_i32 = arith.constant 0 : i32
    %c0_i32_0 = arith.constant 0 : i32
    return %arg0, %arg1, %c0_i32 : i32, i32, i32
  }
  func.func @transform_1(%arg0: i32, %arg1: i32) -> (i32, i32, i32) {
    %c0_i32 = arith.constant 0 : i32
    %c0_i32_0 = arith.constant 0 : i32
    %c0_i32_1 = arith.constant 0 : i32
    return %arg0, %c0_i32, %c0_i32_0 : i32, i32, i32
  }
  func.func @transform_2(%arg0: i32, %arg1: i32) -> (i32, i32, i32) {
    %c0_i32 = arith.constant 0 : i32
    %c0_i32_0 = arith.constant 0 : i32
    %c0_i32_1 = arith.constant 0 : i32
    return %arg0, %c0_i32, %c0_i32_0 : i32, i32, i32
  }
  func.func @transform_3(%arg0: i32, %arg1: i32) -> (i32, i32) {
    %c0_i32 = arith.constant 0 : i32
    %c0_i32_0 = arith.constant 0 : i32
    %c0_i32_1 = arith.constant 0 : i32
    return %c0_i32, %c0_i32_0 : i32, i32
  }
  func.func @transform_4(%arg0: i32, %arg1: i32) -> (i32, i32) {
    %c0_i32 = arith.constant 0 : i32
    %c0_i32_0 = arith.constant 0 : i32
    %c0_i32_1 = arith.constant 0 : i32
    return %c0_i32, %c0_i32_0 : i32, i32
  }
  func.func @transform_5(%arg0: i32, %arg1: i32) -> (i32, i32, i32) {
    %c0_i32 = arith.constant 0 : i32
    %c0_i32_0 = arith.constant 0 : i32
    return %arg0, %arg1, %c0_i32 : i32, i32, i32
  }
  func.func @transform_6(%arg0: i32, %arg1: i32) -> (i32, i32, i32) {
    %c0_i32 = arith.constant 0 : i32
    %c0_i32_0 = arith.constant 0 : i32
    return %arg0, %arg1, %c0_i32 : i32, i32, i32
  }
}

module attributes {stable_mosaic.version = 11 : i64} {
  func.func @_attention_adj_kernel(%arg0: i32, %arg1: i32, %arg2: memref<1x8x32xbf16, #tpu.memory_space<vmem>>, %arg3: memref<1x8x32xbf16, #tpu.memory_space<vmem>>, %arg4: memref<1x8x32xbf16, #tpu.memory_space<vmem>>, %arg5: memref<32x32xbf16, #tpu.memory_space<vmem>>, %arg6: memref<1x32xf32, #tpu.memory_space<vmem>>, %arg7: memref<1x8x32xf32, #tpu.memory_space<vmem>>, %arg8: memref<1x8x8xf32, #tpu.memory_space<vmem>>) attributes {dimension_semantics = [#tpu.dimension_semantics<parallel>, #tpu.dimension_semantics<parallel>], iteration_bounds = array<i64: 2, 1>, scalar_prefetch = 0 : i64, scratch_operands = 0 : i64, tpu.core_type = #tpu.core_type<tc>, window_params = [{transform_indices = @transform_0, window_bounds = array<i64: 1, 8, 32>}, {transform_indices = @transform_1, window_bounds = array<i64: 1, 8, 32>}, {transform_indices = @transform_2, window_bounds = array<i64: 1, 8, 32>}, {pipeline_mode = #tpu.pipeline_mode<synchronous>, transform_indices = @transform_3, window_bounds = array<i64: 32, 32>}, {pipeline_mode = #tpu.pipeline_mode<synchronous>, transform_indices = @transform_4, window_bounds = array<i64: 1, 32>}, {transform_indices = @transform_5, window_bounds = array<i64: 1, 8, 32>}, {transform_indices = @transform_6, window_bounds = array<i64: 1, 8, 8>}]} {
    %c0 = arith.constant 0 : index
    %c0_0 = arith.constant 0 : index
    %c0_1 = arith.constant 0 : index
    %0 = vector.load %arg2[%c0, %c0_0, %c0_1] : memref<1x8x32xbf16, #tpu.memory_space<vmem>>, vector<1x8x32xbf16>
    %1 = vector.shape_cast %0 : vector<1x8x32xbf16> to vector<8x32xbf16>
    %c0_2 = arith.constant 0 : index
    %c0_3 = arith.constant 0 : index
    %2 = vector.load %arg5[%c0_2, %c0_3] : memref<32x32xbf16, #tpu.memory_space<vmem>>, vector<32x32xbf16>
    %cst = arith.constant dense<0.000000e+00> : vector<8x32xf32>
    %3 = tpu.matmul %1, %2, %cst {dimension_numbers = #tpu.dot_dimension_numbers<[1], [0], [0], [1], [0, 0, 1, 1], [], []>} : vector<8x32xbf16>, vector<32x32xbf16>, vector<8x32xf32> -> vector<8x32xf32>
    %c0_4 = arith.constant 0 : index
    %c0_5 = arith.constant 0 : index
    %4 = vector.load %arg6[%c0_4, %c0_5] : memref<1x32xf32, #tpu.memory_space<vmem>>, vector<1x32xf32>
    %5 = vector.broadcast %4 : vector<1x32xf32> to vector<8x32xf32>
    %6 = arith.addf %3, %5 : vector<8x32xf32>
    %7 = arith.truncf %6 : vector<8x32xf32> to vector<8x32xbf16>
    %c0_6 = arith.constant 0 : index
    %c0_7 = arith.constant 0 : index
    %c0_8 = arith.constant 0 : index
    %8 = vector.load %arg3[%c0_6, %c0_7, %c0_8] : memref<1x8x32xbf16, #tpu.memory_space<vmem>>, vector<1x8x32xbf16>
    %9 = vector.shape_cast %8 : vector<1x8x32xbf16> to vector<8x32xbf16>
    %cst_9 = arith.constant dense<0.000000e+00> : vector<8x8xf32>
    %10 = tpu.matmul %7, %9, %cst_9 {dimension_numbers = #tpu.dot_dimension_numbers<[1], [1], [0], [0], [0, 0, 1, 0], [], []>} : vector<8x32xbf16>, vector<8x32xbf16>, vector<8x8xf32> -> vector<8x8xf32>
    %c0_10 = arith.constant 0 : index
    %c0_11 = arith.constant 0 : index
    %c0_12 = arith.constant 0 : index
    %11 = vector.load %arg8[%c0_10, %c0_11, %c0_12] : memref<1x8x8xf32, #tpu.memory_space<vmem>>, vector<1x8x8xf32>
    %12 = vector.shape_cast %11 : vector<1x8x8xf32> to vector<8x8xf32>
    %13 = vector.shape_cast %10 : vector<8x8xf32> to vector<1x8x8xf32>
    tpu.vector_store %arg8[%c0_10, %c0_11, %c0_12], %13 {strides = array<i32>} : memref<1x8x8xf32, #tpu.memory_space<vmem>>, vector<1x8x8xf32>,
    %cst_13 = arith.constant dense<0xFF800000> : vector<8xf32>
    %14 = vector.multi_reduction <maximumf>, %10, %cst_13 [1] : vector<8x8xf32> to vector<8xf32>
    %15 = vector.shape_cast %14 : vector<8xf32> to vector<8x1xf32>
    %16 = vector.broadcast %15 : vector<8x1xf32> to vector<8x8xf32>
    %17 = arith.subf %10, %16 : vector<8x8xf32>
    %18 = math.exp %17 : vector<8x8xf32>
    %cst_14 = arith.constant dense<0.000000e+00> : vector<8xf32>
    %19 = vector.multi_reduction <add>, %18, %cst_14 [1] : vector<8x8xf32> to vector<8xf32>
    %20 = vector.shape_cast %19 : vector<8xf32> to vector<8x1xf32>
    %21 = tpu.reciprocal %20 {approx = true} : vector<8x1xf32> -> vector<8x1xf32>
    %22 = vector.broadcast %21 : vector<8x1xf32> to vector<8x8xf32>
    %23 = arith.mulf %18, %22 : vector<8x8xf32>
    %24 = arith.truncf %23 : vector<8x8xf32> to vector<8x8xbf16>
    %c0_15 = arith.constant 0 : index
    %c0_16 = arith.constant 0 : index
    %c0_17 = arith.constant 0 : index
    %25 = vector.load %arg4[%c0_15, %c0_16, %c0_17] : memref<1x8x32xbf16, #tpu.memory_space<vmem>>, vector<1x8x32xbf16>
    %26 = vector.shape_cast %25 : vector<1x8x32xbf16> to vector<8x32xbf16>
    %cst_18 = arith.constant dense<0.000000e+00> : vector<8x32xf32>
    %27 = tpu.matmul %24, %26, %cst_18 {dimension_numbers = #tpu.dot_dimension_numbers<[1], [0], [0], [1], [0, 0, 1, 1], [], []>} : vector<8x8xbf16>, vector<8x32xbf16>, vector<8x32xf32> -> vector<8x32xf32>
    %c0_19 = arith.constant 0 : index
    %c0_20 = arith.constant 0 : index
    %c0_21 = arith.constant 0 : index
    %28 = vector.load %arg7[%c0_19, %c0_20, %c0_21] : memref<1x8x32xf32, #tpu.memory_space<vmem>>, vector<1x8x32xf32>
    %29 = vector.shape_cast %28 : vector<1x8x32xf32> to vector<8x32xf32>
    %30 = vector.shape_cast %27 : vector<8x32xf32> to vector<1x8x32xf32>
    tpu.vector_store %arg7[%c0_19, %c0_20, %c0_21], %30 {strides = array<i32>} : memref<1x8x32xf32, #tpu.memory_space<vmem>>, vector<1x8x32xf32>,
    return
  }
  func.func @transform_0(%arg0: i32, %arg1: i32) -> (i32, i32, i32) {
    %c0_i32 = arith.constant 0 : i32
    %c0_i32_0 = arith.constant 0 : i32
    return %arg0, %arg1, %c0_i32 : i32, i32, i32
  }
  func.func @transform_1(%arg0: i32, %arg1: i32) -> (i32, i32, i32) {
    %c0_i32 = arith.constant 0 : i32
    %c0_i32_0 = arith.constant 0 : i32
    %c0_i32_1 = arith.constant 0 : i32
    return %arg0, %c0_i32, %c0_i32_0 : i32, i32, i32
  }
  func.func @transform_2(%arg0: i32, %arg1: i32) -> (i32, i32, i32) {
    %c0_i32 = arith.constant 0 : i32
    %c0_i32_0 = arith.constant 0 : i32
    %c0_i32_1 = arith.constant 0 : i32
    return %arg0, %c0_i32, %c0_i32_0 : i32, i32, i32
  }
  func.func @transform_3(%arg0: i32, %arg1: i32) -> (i32, i32) {
    %c0_i32 = arith.constant 0 : i32
    %c0_i32_0 = arith.constant 0 : i32
    %c0_i32_1 = arith.constant 0 : i32
    return %c0_i32, %c0_i32_0 : i32, i32
  }
  func.func @transform_4(%arg0: i32, %arg1: i32) -> (i32, i32) {
    %c0_i32 = arith.constant 0 : i32
    %c0_i32_0 = arith.constant 0 : i32
    %c0_i32_1 = arith.constant 0 : i32
    return %c0_i32, %c0_i32_0 : i32, i32
  }
  func.func @transform_5(%arg0: i32, %arg1: i32) -> (i32, i32, i32) {
    %c0_i32 = arith.constant 0 : i32
    %c0_i32_0 = arith.constant 0 : i32
    return %arg0, %arg1, %c0_i32 : i32, i32, i32
  }
  func.func @transform_6(%arg0: i32, %arg1: i32) -> (i32, i32, i32) {
    %c0_i32 = arith.constant 0 : i32
    %c0_i32_0 = arith.constant 0 : i32
    return %arg0, %arg1, %c0_i32 : i32, i32, i32
  }
}

</mosaic_0001>

<llo_original>
// kernel: tpu_custom_call.1
$region0: #{tpu_custom_call.1}
  #allocation0 [shape = 'u32[]', space=smem, size = 0x4, offset = 0x4, fixed_abs, tag = 'smem constant byte address 0x4 - core index']
  #allocation1 [shape = 'u32[72,128]{1,0:T(1,128)}', space=vmem, size = 0x9000, scoped, tag = 'internal scratch']
  %s0 = inlined_call_operand.hbm [shape: bf16[2,8,32], index: 0, kind: input, shape index: {}]
  %s1 = inlined_call_operand.hbm [shape: bf16[2,8,32], index: 1, kind: input, shape index: {}]
  %s2 = inlined_call_operand.hbm [shape: bf16[2,8,32], index: 2, kind: input, shape index: {}]
  %s3 = inlined_call_operand.hbm [shape: bf16[32,32], index: 3, kind: input, shape index: {}]
  %s4 = inlined_call_operand.vmem [shape: f32[1,32], index: 4, kind: input, shape index: {}]
  %s5 = inlined_call_operand.hbm [shape: f32[2,8,32], index: 5, kind: output, shape index: {0}]
  %s6 = inlined_call_operand.hbm [shape: f32[2,8,8], index: 6, kind: output, shape index: {1}]
  %7 = xla_tuple %s5, %s6
  %s8 = sld [smem:[#allocation0]]
  $region77: #{tpu_custom_call.1} parent=0
    _
  %s10 = ssub.s32 1, %s8
  %s11 = scalar_select 0, %s10, %s8
  $region1: #{tpu_custom_call.1} parent=0
    #allocation2 [shape = 'u8[4096]{0}', space=vmem, size = 0x1000, scoped, tag = 'input window, operand 0']
    #allocation3 [shape = 's32[2]{0}', space=sflag, size = 0x8, scoped, tag = 'scoped memory for tpu_custom_call.1']
    #allocation4 [shape = 's32[2]{0}', space=sflag, size = 0x8, scoped, tag = 'scoped memory for tpu_custom_call.1']
    #allocation5 [shape = 'u8[2048]{0}', space=vmem, size = 0x800, scoped, tag = 'input window, operand 1, single buffered']
    #allocation6 [shape = 's32[1]{0}', space=sflag, size = 0x4, scoped, tag = 'scoped memory for tpu_custom_call.1']
    #allocation7 [shape = 'u8[2048]{0}', space=vmem, size = 0x800, scoped, tag = 'input window, operand 2, single buffered']
    #allocation8 [shape = 'u8[8192]{0}', space=vmem, size = 0x2000, scoped, tag = 'input window, operand 3, single buffered']
    #allocation9 [shape = 's32[1]{0}', space=sflag, size = 0x4, scoped, tag = 'scoped memory for tpu_custom_call.1']
    #allocation10 [shape = 'u8[8192]{0}', space=vmem, size = 0x2000, scoped, tag = 'output window, operand 0']
    #allocation11 [shape = 'u8[8192]{0}', space=vmem, size = 0x2000, scoped, tag = 'output window, operand 1']
    #allocation12 [shape = 's32[2]{0}', space=sflag, size = 0x8, scoped, tag = 'scoped memory for tpu_custom_call.1']
    %12 = vsyncpa [#allocation3], 0
    %s13 = scalar_lea.sflag [#allocation3], 1
    %14 = vsyncpa %s13, 0
    %15 = vsyncpa [#allocation6], 0
    %16 = vsyncpa [#allocation9], 0
    %17 = vsyncpa [#allocation4], 0
    %s18 = scalar_lea.sflag [#allocation4], 1
    %19 = vsyncpa %s18, 0
    %20 = vsyncpa [#allocation12], 0
    %s21 = scalar_lea.sflag [#allocation12], 1
    %22 = vsyncpa %s21, 0
    loop: start=0, step=1, limit=4
    $region2: #{tpu_custom_call.1} parent=1 // loop_pre_header
      _
    $region3: #{tpu_custom_call.1} parent=1 // loop_header
      %s24 = sphi 0, %s28
      %p25 = scmp.ge.s32.totalorder %s24, 4
      %s31 = sphi 0, %s43
      %s32 = sphi 0, %s39
      %s33 = sphi 0, %s31
      %s34 = sphi 0, %s32
      %s35 = sphi 0, %s33
      %s36 = sphi 0, %s34
      %s48 = sphi 0, %s50
      %s51 = sphi 0, %s48
      %s52 = sphi 0, %s51
      %s68 = sphi 0, %s52
      %s74 = sphi 0, %s76
      %s77 = sphi 0, %s74
      %s78 = sphi 0, %s77
      %s94 = sphi 0, %s78
      %s100 = sphi 0, %s102
      %s103 = sphi 0, %s100
      %s104 = sphi 0, %s103
      %s120 = sphi 0, %s104
      %s124 = sphi 0, %s124
      %s126 = sphi 0, %s124
      %s127 = sphi 0, %s126
      %s141 = sphi 0, %s127
      %s145 = sphi 0, %s145
      %s147 = sphi 0, %s145
      %s148 = sphi 0, %s147
      %s162 = sphi 0, %s148
      %s170 = sphi 0, %s172
      %s173 = sphi 0, %s170
      %s174 = sphi 0, %s173
      %s190 = sphi 0, %s174
      %s198 = sphi 0, %s200
      %s201 = sphi 0, %s198
      %s202 = sphi 0, %s201
      %s218 = sphi 0, %s202
    $region4: #{tpu_custom_call.1} parent=1 // loop_header_branch
      %27 = sbr.rel (%p25) target = $region8
    $region5: #{tpu_custom_call.1} parent=1 // loop_body
      %s29 = ssub.s32 %s24, 1
      %s30 = ssub.s32 %s24, 2
      %s37 = sadd.s32 1, %s32
      %p38 = scmp.ge.s32.totalorder %s37, 1
      %s39 = scalar_select %p38, 0, %s37
      %s40 = sadd.s32 1, %s31
      %s41 = scalar_select %p38, %s40, %s31
      %p42 = scmp.ge.s32.totalorder %s41, 2
      %s43 = scalar_select %p42, 0, %s41
      %s44 = ssub.s32 %s31, %s43
      %s45 = ssub.s32 %s32, %s39
      %s46 = sor.u32 %s44, %s45
      %p47 = scmp.eq.s32.totalorder %s46, 0
      %s49 = sadd.s32 %s48, 1
      %s50 = scalar_select %p47, %s48, %s49
      %p53 = pneg %p47
      %p54 = scmp.eq.s32.totalorder %s24, 1
      %p55 = por %p53, %p54
      %p56 = scmp.ne.s32.totalorder %s48, %s51
      %p57 = scmp.eq.s32.totalorder %s24, 0
      %p58 = por %p56, %p57
      %p59 = scmp.ne.s32.totalorder %s48, %s51
      %p60 = scmp.eq.s32.totalorder %s29, 1
      %p61 = por %p59, %p60
      %p62 = scmp.ne.s32.totalorder %s51, %s52
      %p63 = scmp.eq.s32.totalorder %s29, 0
      %p64 = por %p62, %p63
      %p65 = scmp.ne.s32.totalorder %s51, %s52
      %p66 = scmp.eq.s32.totalorder %s30, 1
      %p67 = por %p65, %p66
      %p69 = scmp.ne.s32.totalorder %s52, %s68
      %p70 = scmp.eq.s32.totalorder %s30, 0
      %p71 = por %p69, %p70
      %s72 = ssub.s32 %s31, %s43
      %p73 = scmp.eq.s32.totalorder %s72, 0
      %s75 = sadd.s32 %s74, 1
      %s76 = scalar_select %p73, %s74, %s75
      %p79 = pneg %p73
      %p80 = scmp.eq.s32.totalorder %s24, 1
      %p81 = por %p79, %p80
      %p82 = scmp.ne.s32.totalorder %s74, %s77
      %p83 = scmp.eq.s32.totalorder %s24, 0
      %p84 = por %p82, %p83
      %p85 = scmp.ne.s32.totalorder %s74, %s77
      %p86 = scmp.eq.s32.totalorder %s29, 1
      %p87 = por %p85, %p86
      %p88 = scmp.ne.s32.totalorder %s77, %s78
      %p89 = scmp.eq.s32.totalorder %s29, 0
      %p90 = por %p88, %p89
      %p91 = scmp.ne.s32.totalorder %s77, %s78
      %p92 = scmp.eq.s32.totalorder %s30, 1
      %p93 = por %p91, %p92
      %p95 = scmp.ne.s32.totalorder %s78, %s94
      %p96 = scmp.eq.s32.totalorder %s30, 0
      %p97 = por %p95, %p96
      %s98 = ssub.s32 %s31, %s43
      %p99 = scmp.eq.s32.totalorder %s98, 0
      %s101 = sadd.s32 %s100, 1
      %s102 = scalar_select %p99, %s100, %s101
      %p105 = pneg %p99
      %p106 = scmp.eq.s32.totalorder %s24, 1
      %p107 = por %p105, %p106
      %p108 = scmp.ne.s32.totalorder %s100, %s103
      %p109 = scmp.eq.s32.totalorder %s24, 0
      %p110 = por %p108, %p109
      %p111 = scmp.ne.s32.totalorder %s100, %s103
      %p112 = scmp.eq.s32.totalorder %s29, 1
      %p113 = por %p111, %p112
      %p114 = scmp.ne.s32.totalorder %s103, %s104
      %p115 = scmp.eq.s32.totalorder %s29, 0
      %p116 = por %p114, %p115
      %p117 = scmp.ne.s32.totalorder %s103, %s104
      %p118 = scmp.eq.s32.totalorder %s30, 1
      %p119 = por %p117, %p118
      %p121 = scmp.ne.s32.totalorder %s104, %s120
      %p122 = scmp.eq.s32.totalorder %s30, 0
      %p123 = por %p121, %p122
      %s125 = sadd.s32 %s124, 1
      %p128 = scmp.eq.s32.totalorder %s24, 1
      %p129 = scmp.ne.s32.totalorder %s124, %s126
      %p130 = scmp.eq.s32.totalorder %s24, 0
      %p131 = por %p129, %p130
      %p132 = scmp.ne.s32.totalorder %s124, %s126
      %p133 = scmp.eq.s32.totalorder %s29, 1
      %p134 = por %p132, %p133
      %p135 = scmp.ne.s32.totalorder %s126, %s127
      %p136 = scmp.eq.s32.totalorder %s29, 0
      %p137 = por %p135, %p136
      %p138 = scmp.ne.s32.totalorder %s126, %s127
      %p139 = scmp.eq.s32.totalorder %s30, 1
      %p140 = por %p138, %p139
      %p142 = scmp.ne.s32.totalorder %s127, %s141
      %p143 = scmp.eq.s32.totalorder %s30, 0
      %p144 = por %p142, %p143
      %s146 = sadd.s32 %s145, 1
      %p149 = scmp.eq.s32.totalorder %s24, 1
      %p150 = scmp.ne.s32.totalorder %s145, %s147
      %p151 = scmp.eq.s32.totalorder %s24, 0
      %p152 = por %p150, %p151
      %p153 = scmp.ne.s32.totalorder %s145, %s147
      %p154 = scmp.eq.s32.totalorder %s29, 1
      %p155 = por %p153, %p154
      %p156 = scmp.ne.s32.totalorder %s147, %s148
      %p157 = scmp.eq.s32.totalorder %s29, 0
      %p158 = por %p156, %p157
      %p159 = scmp.ne.s32.totalorder %s147, %s148
      %p160 = scmp.eq.s32.totalorder %s30, 1
      %p161 = por %p159, %p160
      %p163 = scmp.ne.s32.totalorder %s148, %s162
      %p164 = scmp.eq.s32.totalorder %s30, 0
      %p165 = por %p163, %p164
      %s166 = ssub.s32 %s31, %s43
      %s167 = ssub.s32 %s32, %s39
      %s168 = sor.u32 %s166, %s167
      %p169 = scmp.eq.s32.totalorder %s168, 0
      %s171 = sadd.s32 %s170, 1
      %s172 = scalar_select %p169, %s170, %s171
      %p175 = pneg %p169
      %p176 = scmp.eq.s32.totalorder %s24, 1
      %p177 = por %p175, %p176
      %p178 = scmp.ne.s32.totalorder %s170, %s173
      %p179 = scmp.eq.s32.totalorder %s24, 0
      %p180 = por %p178, %p179
      %p181 = scmp.ne.s32.totalorder %s170, %s173
      %p182 = scmp.eq.s32.totalorder %s29, 1
      %p183 = por %p181, %p182
      %p184 = scmp.ne.s32.totalorder %s173, %s174
      %p185 = scmp.eq.s32.totalorder %s29, 0
      %p186 = por %p184, %p185
      %p187 = scmp.ne.s32.totalorder %s173, %s174
      %p188 = scmp.eq.s32.totalorder %s30, 1
      %p189 = por %p187, %p188
      %p191 = scmp.ne.s32.totalorder %s174, %s190
      %p192 = scmp.eq.s32.totalorder %s30, 0
      %p193 = por %p191, %p192
      %s194 = ssub.s32 %s31, %s43
      %s195 = ssub.s32 %s32, %s39
      %s196 = sor.u32 %s194, %s195
      %p197 = scmp.eq.s32.totalorder %s196, 0
      %s199 = sadd.s32 %s198, 1
      %s200 = scalar_select %p197, %s198, %s199
      %p203 = pneg %p197
      %p204 = scmp.eq.s32.totalorder %s24, 1
      %p205 = por %p203, %p204
      %p206 = scmp.ne.s32.totalorder %s198, %s201
      %p207 = scmp.eq.s32.totalorder %s24, 0
      %p208 = por %p206, %p207
      %p209 = scmp.ne.s32.totalorder %s198, %s201
      %p210 = scmp.eq.s32.totalorder %s29, 1
      %p211 = por %p209, %p210
      %p212 = scmp.ne.s32.totalorder %s201, %s202
      %p213 = scmp.eq.s32.totalorder %s29, 0
      %p214 = por %p212, %p213
      %p215 = scmp.ne.s32.totalorder %s201, %s202
      %p216 = scmp.eq.s32.totalorder %s30, 1
      %p217 = por %p215, %p216
      %p219 = scmp.ne.s32.totalorder %s202, %s218
      %p220 = scmp.eq.s32.totalorder %s30, 0
      %p221 = por %p219, %p220
      %p222 = scmp.le.s32.totalorder 1, %s24
      %p223 = scmp.lt.s32.totalorder %s24, 3
      %p224 = pnand %p222, %p223
      %p225 = pneg %p224
      // Predicated region
      $region9: #{tpu_custom_call.1} parent=5 // pred_check
        _
      $region10: #{tpu_custom_call.1} parent=5 // pred_check_branch
        %227 = sbr.rel (%p224) target = $region12
      $region11: #{tpu_custom_call.1} parent=5 // pred_region
        %s228 = ssub.s32 %s24, 1
        // Predicated region
        $region13: #{tpu_custom_call.1} parent=11 // pred_check
          %p229 = pneg %p90
        $region14: #{tpu_custom_call.1} parent=11 // pred_check_branch
          %231 = sbr.rel (%p229) target = $region16
        $region15: #{tpu_custom_call.1} parent=11 // pred_region
          %233 = vsyncadd [#allocation6], 0
          %s234 = smul.addr %s33, 4
          %s235 = scalar_lea.hbm %s1, %s234
          %s237 = sshll.u32 %s235, 4
          %s238 = int_to_ptr.hbm [resolvable:$true] %s237
          %s239 = sshll.u32 [#allocation5], 4
          %s240 = int_to_ptr.vmem [resolvable:$true] %s239
          %242 = dma.hbm_to_vmem [thread:$0]  %s238, 64, %s240, [#allocation6]
        $region16: #{tpu_custom_call.1} parent=11 // pred_fallthru
          _
        // Predicated region
        $region17: #{tpu_custom_call.1} parent=11 // pred_check
          %p243 = pneg %p116
        $region18: #{tpu_custom_call.1} parent=11 // pred_check_branch
          %245 = sbr.rel (%p243) target = $region20
        $region19: #{tpu_custom_call.1} parent=11 // pred_region
          %247 = vsyncadd [#allocation6], 0
          %s248 = smul.addr %s33, 4
          %s249 = scalar_lea.hbm %s2, %s248
          %s251 = sshll.u32 %s249, 4
          %s252 = int_to_ptr.hbm [resolvable:$true] %s251
          %s253 = sshll.u32 [#allocation7], 4
          %s254 = int_to_ptr.vmem [resolvable:$true] %s253
          %256 = dma.hbm_to_vmem [thread:$0]  %s252, 64, %s254, [#allocation6]
        $region20: #{tpu_custom_call.1} parent=11 // pred_fallthru
          _
        // Predicated region
        $region21: #{tpu_custom_call.1} parent=11 // pred_check
          %p257 = pneg %p137
        $region22: #{tpu_custom_call.1} parent=11 // pred_check_branch
          %259 = sbr.rel (%p257) target = $region24
        $region23: #{tpu_custom_call.1} parent=11 // pred_region
          %261 = vsyncadd [#allocation9], 0
          %s262 = sshll.u32 %s3, 4
          %s263 = int_to_ptr.hbm [resolvable:$true] %s262
          %s264 = sshll.u32 [#allocation8], 4
          %s265 = int_to_ptr.vmem [resolvable:$true] %s264
          %270 = dma.hbm_to_vmem [thread:$0]  %s263, 256, %s265, [#allocation9], 64, 64, 4
        $region24: #{tpu_custom_call.1} parent=11 // pred_fallthru
          _
        // Predicated region
        $region25: #{tpu_custom_call.1} parent=11 // pred_check
          %p271 = pneg %p158
        $region26: #{tpu_custom_call.1} parent=11 // pred_check_branch
          %273 = sbr.rel (%p271) target = $region28
        $region27: #{tpu_custom_call.1} parent=11 // pred_region
          _
        $region28: #{tpu_custom_call.1} parent=11 // pred_fallthru
          _
      $region12: #{tpu_custom_call.1} parent=5 // pred_fallthru
        _
      %p274 = scmp.lt.s32.totalorder %s24, 2
      // Predicated region
      $region29: #{tpu_custom_call.1} parent=5 // pred_check
        %p275 = pneg %p274
      $region30: #{tpu_custom_call.1} parent=5 // pred_check_branch
        %277 = sbr.rel (%p275) target = $region32
      $region31: #{tpu_custom_call.1} parent=5 // pred_region
        // Predicated region
        $region33: #{tpu_custom_call.1} parent=31 // pred_check
          %p278 = pneg %p58
        $region34: #{tpu_custom_call.1} parent=31 // pred_check_branch
          %280 = sbr.rel (%p278) target = $region36
        $region35: #{tpu_custom_call.1} parent=31 // pred_region
          %s281 = sand.u32 %s48, 1
          %s282 = scalar_lea.sflag [#allocation3], %s281
          %s283 = sand.u32 %s48, 1
          %s284 = smul.addr %s283, 4
          %s285 = scalar_lea.vmem [#allocation2], %s284
          %287 = vsyncadd %s282, 0
          %s288 = sadd.s32 %s32, %s31
          %s289 = smul.addr %s288, 4
          %s290 = scalar_lea.hbm %s0, %s289
          %s292 = sshll.u32 %s290, 4
          %s293 = int_to_ptr.hbm [resolvable:$true] %s292
          %s294 = sshll.u32 %s285, 4
          %s295 = int_to_ptr.vmem [resolvable:$true] %s294
          %297 = dma.hbm_to_vmem [thread:$0]  %s293, 64, %s295, %s282
        $region36: #{tpu_custom_call.1} parent=31 // pred_fallthru
          _
      $region32: #{tpu_custom_call.1} parent=5 // pred_fallthru
        _
      %p298 = scmp.le.s32.totalorder 1, %s24
      %p299 = scmp.lt.s32.totalorder %s24, 3
      %p300 = pnand %p298, %p299
      %p301 = pneg %p300
      // Predicated region
      $region37: #{tpu_custom_call.1} parent=5 // pred_check
        _
      $region38: #{tpu_custom_call.1} parent=5 // pred_check_branch
        %303 = sbr.rel (%p300) target = $region40
      $region39: #{tpu_custom_call.1} parent=5 // pred_region
        %s304 = ssub.s32 %s24, 1
        %s305 = sand.u32 %s51, 1
        %s306 = scalar_lea.sflag [#allocation3], %s305
        %s307 = sand.u32 %s51, 1
        %s308 = smul.addr %s307, 4
        %s309 = scalar_lea.vmem [#allocation2], %s308
        // Predicated region
        $region41: #{tpu_custom_call.1} parent=39 // pred_check
          %p310 = pneg %p64
        $region42: #{tpu_custom_call.1} parent=39 // pred_check_branch
          %312 = sbr.rel (%p310) target = $region44
        $region43: #{tpu_custom_call.1} parent=39 // pred_region
          %314 = dma.done %s306, 64
        $region44: #{tpu_custom_call.1} parent=39 // pred_fallthru
          _
        // Predicated region
        $region45: #{tpu_custom_call.1} parent=39 // pred_check
          %p315 = pneg %p90
        $region46: #{tpu_custom_call.1} parent=39 // pred_check_branch
          %317 = sbr.rel (%p315) target = $region48
        $region47: #{tpu_custom_call.1} parent=39 // pred_region
          %319 = dma.done [#allocation6], 64
        $region48: #{tpu_custom_call.1} parent=39 // pred_fallthru
          _
        // Predicated region
        $region49: #{tpu_custom_call.1} parent=39 // pred_check
          %p320 = pneg %p116
        $region50: #{tpu_custom_call.1} parent=39 // pred_check_branch
          %322 = sbr.rel (%p320) target = $region52
        $region51: #{tpu_custom_call.1} parent=39 // pred_region
          %324 = dma.done [#allocation6], 64
        $region52: #{tpu_custom_call.1} parent=39 // pred_fallthru
          _
        // Predicated region
        $region53: #{tpu_custom_call.1} parent=39 // pred_check
          %p325 = pneg %p137
        $region54: #{tpu_custom_call.1} parent=39 // pred_check_branch
          %327 = sbr.rel (%p325) target = $region56
        $region55: #{tpu_custom_call.1} parent=39 // pred_region
          %329 = dma.done [#allocation9], 256
        $region56: #{tpu_custom_call.1} parent=39 // pred_fallthru
          _
        %s330 = sand.u32 %s51, 1
        %s331 = scalar_lea.sflag [#allocation3], %s330
        %s332 = sand.u32 %s51, 1
        %s333 = smul.addr %s332, 4
        %s334 = scalar_lea.vmem [#allocation2], %s333
        %p335 = pneg %p64
        %p336 = pneg %p61
        %p337 = pneg %p90
        %p338 = pneg %p87
        %p339 = pneg %p116
        %p340 = pneg %p113
        %p341 = pneg %p137
        %p342 = pneg %p134
        %p343 = pneg %p158
        %p344 = pneg %p155
        %p345 = pneg %p186
        %p346 = pneg %p183
        %s347 = sand.u32 %s173, 1
        %s348 = scalar_lea.sflag [#allocation4], %s347
        %s349 = sand.u32 %s173, 1
        %s350 = smul.addr %s349, 8
        %s351 = scalar_lea.vmem [#allocation10], %s350
        %p352 = pneg %p214
        %p353 = pneg %p211
        %s354 = sand.u32 %s201, 1
        %s355 = scalar_lea.sflag [#allocation12], %s354
        %s356 = sand.u32 %s201, 1
        %s357 = smul.addr %s356, 8
        %s358 = scalar_lea.vmem [#allocation11], %s357
        %v360 = vld [vmem:[%s309] sm:$0xf]
        %v361 = vld [vmem:[#allocation8] sm:$0xf]
        %v362 = vld [vmem:[#allocation8 + $0x4] sm:$0xf]
        %v363 = vld [vmem:[#allocation8 + $0x8] sm:$0xf]
        %v364 = vld [vmem:[#allocation8 + $0xc] sm:$0xf]
        %v365 = vld [vmem:[%s4] sm:$0x1]
        %v367 = vperm.slane %v365, 0
        %v373 = vunpack.c.l.b16 %v361
        %v374 = vunpack.c.l.b16 %v362
        %v375 = vunpack.c.l.b16 %v363
        %v376 = vunpack.c.l.b16 %v364
        %v377 = vpack.c.b16 %v374, %v373
        %v378 = vpack.c.b16 %v376, %v375
        %vm381 = vcmask 261120
        %v383 = vsel %vm381, %v360, 0
        %385 = vmatpush.bf16.msra.mxu0 0
        %386 = vmatpush.bf16.msra.mxu0 0
        %387 = vmatpush.bf16.msra.mxu0 0
        %388 = vmatpush.bf16.msra.mxu0 0
        %389 = vmatpush.bf16.msra.mxu0 0
        %390 = vmatpush.bf16.msra.mxu0 0
        %391 = vmatpush.bf16.msra.mxu0 %v378
        %392 = vmatpush.bf16.msra.mxu0 %v377
        %393 = vmatmul.bf16.gmra.mxu0 %v383
        %v394 = vpop.f32.mrf.mxu0
        %v395 = vadd.f32 %v367, %v394
        %v396 = vpop.f32.mrf.mxu0
        %397 = vdwg.mxu0
        %v398 = vpack.c.bf16 %v395, %v395
        %v399 = vld [vmem:[#allocation5] sm:$0xf]
        %v401 = vsel %vm381, %v398, 0
        %v404 = vsel %vm381, %v399, 0
        %406 = vmatpush.bf16.xpose.msra.mxu0 0
        %407 = vmatpush.bf16.xpose.msra.mxu0 0
        %408 = vmatpush.bf16.xpose.msra.mxu0 0
        %409 = vmatpush.bf16.xpose.msra.mxu0 0
        %410 = vmatpush.bf16.xpose.msra.mxu0 0
        %411 = vmatpush.bf16.xpose.msra.mxu0 0
        %412 = vmatpush.bf16.xpose.msra.mxu0 0
        %413 = vmatpush.bf16.xpose.msra.mxu0 %v404
        %414 = vmatmul.bf16.gmra.mxu0 %v401
        %v415 = vpop.f32.mrf.mxu0
        %v416 = vadd.f32 0.0, %v415
        %v417 = vpop.f32.mrf.mxu0
        %418 = vdwg.mxu0
        %vm419 = vcmask 64512
        %420 = vst.msk [vmem:[%s358] sm:$0xff] %vm419, %v416
        %v421 = vsel %vm419, %v416, -inf
        %422 = vmax.xlane.f32.xlu0 %v421
        %v423 = vpop.xlane.xlu0 %422
        %v424 = vsub.f32 %v416, %v423
        %v425 = vmul.f32 %v424, 1.442695
        %v426 = vpow.pop %v425
        %v427 = vsel %vm419, %v426, 0.0
        %428 = vadd.xlane.f32.xlu0 %v427
        %v429 = vpop.xlane.xlu0 %428
        %v430 = vrcp.pop %v429
        %v431 = vmul.f32 %v426, %v430
        %v432 = vpack.c.bf16 %v431, %v431
        %v433 = vld [vmem:[#allocation7] sm:$0xf]
        %v435 = vsel %vm419, %v432, 0
        %vm437 = vcmask 1043456
        %v439 = vsel %vm437, %v433, 0
        %441 = vmatpush.bf16.msra.mxu0 0
        %442 = vmatpush.bf16.msra.mxu0 0
        %443 = vmatpush.bf16.msra.mxu0 0
        %444 = vmatpush.bf16.msra.mxu0 0
        %445 = vmatpush.bf16.msra.mxu0 0
        %446 = vmatpush.bf16.msra.mxu0 0
        %447 = vmatpush.bf16.msra.mxu0 0
        %448 = vmatpush.bf16.msra.mxu0 %v439
        %449 = vmatmul.bf16.gmra.mxu0 %v435
        %v450 = vpop.f32.mrf.mxu0
        %v451 = vadd.f32 0.0, %v450
        %v452 = vpop.f32.mrf.mxu0
        %453 = vdwg.mxu0
        %454 = vst.msk [vmem:[%s351] sm:$0xff] %vm381, %v451
        %s455 = sand.u32 %s173, 1
        %s456 = scalar_lea.sflag [#allocation4], %s455
        %s457 = sand.u32 %s173, 1
        %s458 = smul.addr %s457, 8
        %s459 = scalar_lea.vmem [#allocation10], %s458
        %s460 = sand.u32 %s201, 1
        %s461 = scalar_lea.sflag [#allocation12], %s460
        %s462 = sand.u32 %s201, 1
        %s463 = smul.addr %s462, 8
        %s464 = scalar_lea.vmem [#allocation11], %s463
        // Predicated region
        $region57: #{tpu_custom_call.1} parent=39 // pred_check
          %p465 = pneg %p183
        $region58: #{tpu_custom_call.1} parent=39 // pred_check_branch
          %467 = sbr.rel (%p465) target = $region60
        $region59: #{tpu_custom_call.1} parent=39 // pred_region
          %469 = vsyncadd %s456, 0
          %s470 = sadd.s32 %s34, %s33
          %s471 = smul.addr %s470, 8
          %s472 = scalar_lea.hbm %s5, %s471
          %s474 = sshll.u32 %s459, 4
          %s475 = int_to_ptr.vmem [resolvable:$true] %s474
          %s476 = sshll.u32 %s472, 4
          %s477 = int_to_ptr.hbm [resolvable:$true] %s476
          %479 = dma.vmem_to_hbm [thread:$0]  %s475, 128, %s477, %s456
        $region60: #{tpu_custom_call.1} parent=39 // pred_fallthru
          _
        // Predicated region
        $region61: #{tpu_custom_call.1} parent=39 // pred_check
          %p480 = pneg %p211
        $region62: #{tpu_custom_call.1} parent=39 // pred_check_branch
          %482 = sbr.rel (%p480) target = $region64
        $region63: #{tpu_custom_call.1} parent=39 // pred_region
          %484 = vsyncadd %s461, 0
          %s485 = sadd.s32 %s34, %s33
          %s486 = smul.addr %s485, 8
          %s487 = scalar_lea.hbm %s6, %s486
          %s489 = sshll.u32 %s464, 4
          %s490 = int_to_ptr.vmem [resolvable:$true] %s489
          %s491 = sshll.u32 %s487, 4
          %s492 = int_to_ptr.hbm [resolvable:$true] %s491
          %494 = dma.vmem_to_hbm [thread:$0]  %s490, 128, %s492, %s461
        $region64: #{tpu_custom_call.1} parent=39 // pred_fallthru
          _
      $region40: #{tpu_custom_call.1} parent=5 // pred_fallthru
        _
      %p495 = scmp.le.s32.totalorder 2, %s24
      // Predicated region
      $region65: #{tpu_custom_call.1} parent=5 // pred_check
        %p496 = pneg %p495
      $region66: #{tpu_custom_call.1} parent=5 // pred_check_branch
        %498 = sbr.rel (%p496) target = $region68
      $region67: #{tpu_custom_call.1} parent=5 // pred_region
        %s499 = ssub.s32 %s24, 2
        // Predicated region
        $region69: #{tpu_custom_call.1} parent=67 // pred_check
          %p500 = pneg %p189
        $region70: #{tpu_custom_call.1} parent=67 // pred_check_branch
          %502 = sbr.rel (%p500) target = $region72
        $region71: #{tpu_custom_call.1} parent=67 // pred_region
          %s503 = sand.u32 %s174, 1
          %s504 = scalar_lea.sflag [#allocation4], %s503
          %s505 = sand.u32 %s174, 1
          %s506 = smul.addr %s505, 8
          %s507 = scalar_lea.vmem [#allocation10], %s506
          %509 = dma.done %s504, 128
        $region72: #{tpu_custom_call.1} parent=67 // pred_fallthru
          _
        // Predicated region
        $region73: #{tpu_custom_call.1} parent=67 // pred_check
          %p510 = pneg %p217
        $region74: #{tpu_custom_call.1} parent=67 // pred_check_branch
          %512 = sbr.rel (%p510) target = $region76
        $region75: #{tpu_custom_call.1} parent=67 // pred_region
          %s513 = sand.u32 %s202, 1
          %s514 = scalar_lea.sflag [#allocation12], %s513
          %s515 = sand.u32 %s202, 1
          %s516 = smul.addr %s515, 8
          %s517 = scalar_lea.vmem [#allocation11], %s516
          %519 = dma.done %s514, 128
        $region76: #{tpu_custom_call.1} parent=67 // pred_fallthru
          _
      $region68: #{tpu_custom_call.1} parent=5 // pred_fallthru
        _
    $region6: #{tpu_custom_call.1} parent=1 // loop_footer
      %s28 = sadd.s32 1, %s24
    $region7: #{tpu_custom_call.1} parent=1 // loop_footer_branch
      %23 = sbr.rel target = $region3
    $region8: #{tpu_custom_call.1} parent=1 // loop_exit
      _
    %520 = vsyncpa [#allocation3], 1
    %s521 = scalar_lea.sflag [#allocation3], 1
    %522 = vsyncpa %s521, 1
    %523 = vsyncpa [#allocation6], 1
    %524 = vsyncpa [#allocation9], 1
    %525 = vsyncpa [#allocation4], 1
    %s526 = scalar_lea.sflag [#allocation4], 1
    %527 = vsyncpa %s526, 1
    %528 = vsyncpa [#allocation12], 1
    %s529 = scalar_lea.sflag [#allocation12], 1
    %530 = vsyncpa %s529, 1

// kernel: tpu_custom_call.1
$region0: #{tpu_custom_call.1}
  #allocation0 [shape = 'u32[]', space=smem, size = 0x4, offset = 0x4, fixed_abs, tag = 'smem constant byte address 0x4 - core index']
  #allocation1 [shape = 'u32[72,128]{1,0:T(1,128)}', space=vmem, size = 0x9000, scoped, tag = 'internal scratch']
  %s0 = inlined_call_operand.hbm [shape: bf16[2,8,32], index: 0, kind: input, shape index: {}]
  %s1 = inlined_call_operand.hbm [shape: bf16[2,8,32], index: 1, kind: input, shape index: {}]
  %s2 = inlined_call_operand.hbm [shape: bf16[2,8,32], index: 2, kind: input, shape index: {}]
  %s3 = inlined_call_operand.hbm [shape: bf16[32,32], index: 3, kind: input, shape index: {}]
  %s4 = inlined_call_operand.vmem [shape: f32[1,32], index: 4, kind: input, shape index: {}]
  %s5 = inlined_call_operand.hbm [shape: f32[2,8,32], index: 5, kind: output, shape index: {0}]
  %s6 = inlined_call_operand.hbm [shape: f32[2,8,8], index: 6, kind: output, shape index: {1}]
  %7 = xla_tuple %s5, %s6
  %s8 = sld [smem:[#allocation0]]
  $region77: #{tpu_custom_call.1} parent=0
    _
  %s10 = ssub.s32 1, %s8
  %s11 = scalar_select 0, %s10, %s8
  $region1: #{tpu_custom_call.1} parent=0
    #allocation2 [shape = 'u8[4096]{0}', space=vmem, size = 0x1000, scoped, tag = 'input window, operand 0']
    #allocation3 [shape = 's32[2]{0}', space=sflag, size = 0x8, scoped, tag = 'scoped memory for tpu_custom_call.1']
    #allocation4 [shape = 's32[2]{0}', space=sflag, size = 0x8, scoped, tag = 'scoped memory for tpu_custom_call.1']
    #allocation5 [shape = 'u8[4096]{0}', space=vmem, size = 0x1000, scoped, tag = 'input window, operand 1']
    #allocation6 [shape = 's32[2]{0}', space=sflag, size = 0x8, scoped, tag = 'scoped memory for tpu_custom_call.1']
    #allocation7 [shape = 'u8[4096]{0}', space=vmem, size = 0x1000, scoped, tag = 'input window, operand 2']
    #allocation8 [shape = 'u8[8192]{0}', space=vmem, size = 0x2000, scoped, tag = 'input window, operand 3, single buffered']
    #allocation9 [shape = 's32[1]{0}', space=sflag, size = 0x4, scoped, tag = 'scoped memory for tpu_custom_call.1']
    #allocation10 [shape = 'u8[8192]{0}', space=vmem, size = 0x2000, scoped, tag = 'output window, operand 0']
    #allocation11 [shape = 'u8[8192]{0}', space=vmem, size = 0x2000, scoped, tag = 'output window, operand 1']
    #allocation12 [shape = 's32[2]{0}', space=sflag, size = 0x8, scoped, tag = 'scoped memory for tpu_custom_call.1']
    %12 = vsyncpa [#allocation3], 0
    %s13 = scalar_lea.sflag [#allocation3], 1
    %14 = vsyncpa %s13, 0
    %15 = vsyncpa [#allocation6], 0
    %s16 = scalar_lea.sflag [#allocation6], 1
    %17 = vsyncpa %s16, 0
    %18 = vsyncpa [#allocation9], 0
    %19 = vsyncpa [#allocation4], 0
    %s20 = scalar_lea.sflag [#allocation4], 1
    %21 = vsyncpa %s20, 0
    %22 = vsyncpa [#allocation12], 0
    %s23 = scalar_lea.sflag [#allocation12], 1
    %24 = vsyncpa %s23, 0
    loop: start=0, step=1, limit=4
    $region2: #{tpu_custom_call.1} parent=1 // loop_pre_header
      _
    $region3: #{tpu_custom_call.1} parent=1 // loop_header
      %s26 = sphi 0, %s30
      %p27 = scmp.ge.s32.totalorder %s26, 4
      %s33 = sphi 0, %s45
      %s34 = sphi 0, %s41
      %s35 = sphi 0, %s33
      %s36 = sphi 0, %s34
      %s37 = sphi 0, %s35
      %s38 = sphi 0, %s36
      %s50 = sphi 0, %s52
      %s53 = sphi 0, %s50
      %s54 = sphi 0, %s53
      %s70 = sphi 0, %s54
      %s76 = sphi 0, %s78
      %s79 = sphi 0, %s76
      %s80 = sphi 0, %s79
      %s96 = sphi 0, %s80
      %s102 = sphi 0, %s104
      %s105 = sphi 0, %s102
      %s106 = sphi 0, %s105
      %s122 = sphi 0, %s106
      %s126 = sphi 0, %s126
      %s128 = sphi 0, %s126
      %s129 = sphi 0, %s128
      %s143 = sphi 0, %s129
      %s147 = sphi 0, %s147
      %s149 = sphi 0, %s147
      %s150 = sphi 0, %s149
      %s164 = sphi 0, %s150
      %s172 = sphi 0, %s174
      %s175 = sphi 0, %s172
      %s176 = sphi 0, %s175
      %s192 = sphi 0, %s176
      %s200 = sphi 0, %s202
      %s203 = sphi 0, %s200
      %s204 = sphi 0, %s203
      %s220 = sphi 0, %s204
    $region4: #{tpu_custom_call.1} parent=1 // loop_header_branch
      %29 = sbr.rel (%p27) target = $region8
    $region5: #{tpu_custom_call.1} parent=1 // loop_body
      %s31 = ssub.s32 %s26, 1
      %s32 = ssub.s32 %s26, 2
      %s39 = sadd.s32 1, %s34
      %p40 = scmp.ge.s32.totalorder %s39, 1
      %s41 = scalar_select %p40, 0, %s39
      %s42 = sadd.s32 1, %s33
      %s43 = scalar_select %p40, %s42, %s33
      %p44 = scmp.ge.s32.totalorder %s43, 2
      %s45 = scalar_select %p44, 0, %s43
      %s46 = ssub.s32 %s33, %s45
      %s47 = ssub.s32 %s34, %s41
      %s48 = sor.u32 %s46, %s47
      %p49 = scmp.eq.s32.totalorder %s48, 0
      %s51 = sadd.s32 %s50, 1
      %s52 = scalar_select %p49, %s50, %s51
      %p55 = pneg %p49
      %p56 = scmp.eq.s32.totalorder %s26, 1
      %p57 = por %p55, %p56
      %p58 = scmp.ne.s32.totalorder %s50, %s53
      %p59 = scmp.eq.s32.totalorder %s26, 0
      %p60 = por %p58, %p59
      %p61 = scmp.ne.s32.totalorder %s50, %s53
      %p62 = scmp.eq.s32.totalorder %s31, 1
      %p63 = por %p61, %p62
      %p64 = scmp.ne.s32.totalorder %s53, %s54
      %p65 = scmp.eq.s32.totalorder %s31, 0
      %p66 = por %p64, %p65
      %p67 = scmp.ne.s32.totalorder %s53, %s54
      %p68 = scmp.eq.s32.totalorder %s32, 1
      %p69 = por %p67, %p68
      %p71 = scmp.ne.s32.totalorder %s54, %s70
      %p72 = scmp.eq.s32.totalorder %s32, 0
      %p73 = por %p71, %p72
      %s74 = ssub.s32 %s33, %s45
      %p75 = scmp.eq.s32.totalorder %s74, 0
      %s77 = sadd.s32 %s76, 1
      %s78 = scalar_select %p75, %s76, %s77
      %p81 = pneg %p75
      %p82 = scmp.eq.s32.totalorder %s26, 1
      %p83 = por %p81, %p82
      %p84 = scmp.ne.s32.totalorder %s76, %s79
      %p85 = scmp.eq.s32.totalorder %s26, 0
      %p86 = por %p84, %p85
      %p87 = scmp.ne.s32.totalorder %s76, %s79
      %p88 = scmp.eq.s32.totalorder %s31, 1
      %p89 = por %p87, %p88
      %p90 = scmp.ne.s32.totalorder %s79, %s80
      %p91 = scmp.eq.s32.totalorder %s31, 0
      %p92 = por %p90, %p91
      %p93 = scmp.ne.s32.totalorder %s79, %s80
      %p94 = scmp.eq.s32.totalorder %s32, 1
      %p95 = por %p93, %p94
      %p97 = scmp.ne.s32.totalorder %s80, %s96
      %p98 = scmp.eq.s32.totalorder %s32, 0
      %p99 = por %p97, %p98
      %s100 = ssub.s32 %s33, %s45
      %p101 = scmp.eq.s32.totalorder %s100, 0
      %s103 = sadd.s32 %s102, 1
      %s104 = scalar_select %p101, %s102, %s103
      %p107 = pneg %p101
      %p108 = scmp.eq.s32.totalorder %s26, 1
      %p109 = por %p107, %p108
      %p110 = scmp.ne.s32.totalorder %s102, %s105
      %p111 = scmp.eq.s32.totalorder %s26, 0
      %p112 = por %p110, %p111
      %p113 = scmp.ne.s32.totalorder %s102, %s105
      %p114 = scmp.eq.s32.totalorder %s31, 1
      %p115 = por %p113, %p114
      %p116 = scmp.ne.s32.totalorder %s105, %s106
      %p117 = scmp.eq.s32.totalorder %s31, 0
      %p118 = por %p116, %p117
      %p119 = scmp.ne.s32.totalorder %s105, %s106
      %p120 = scmp.eq.s32.totalorder %s32, 1
      %p121 = por %p119, %p120
      %p123 = scmp.ne.s32.totalorder %s106, %s122
      %p124 = scmp.eq.s32.totalorder %s32, 0
      %p125 = por %p123, %p124
      %s127 = sadd.s32 %s126, 1
      %p130 = scmp.eq.s32.totalorder %s26, 1
      %p131 = scmp.ne.s32.totalorder %s126, %s128
      %p132 = scmp.eq.s32.totalorder %s26, 0
      %p133 = por %p131, %p132
      %p134 = scmp.ne.s32.totalorder %s126, %s128
      %p135 = scmp.eq.s32.totalorder %s31, 1
      %p136 = por %p134, %p135
      %p137 = scmp.ne.s32.totalorder %s128, %s129
      %p138 = scmp.eq.s32.totalorder %s31, 0
      %p139 = por %p137, %p138
      %p140 = scmp.ne.s32.totalorder %s128, %s129
      %p141 = scmp.eq.s32.totalorder %s32, 1
      %p142 = por %p140, %p141
      %p144 = scmp.ne.s32.totalorder %s129, %s143
      %p145 = scmp.eq.s32.totalorder %s32, 0
      %p146 = por %p144, %p145
      %s148 = sadd.s32 %s147, 1
      %p151 = scmp.eq.s32.totalorder %s26, 1
      %p152 = scmp.ne.s32.totalorder %s147, %s149
      %p153 = scmp.eq.s32.totalorder %s26, 0
      %p154 = por %p152, %p153
      %p155 = scmp.ne.s32.totalorder %s147, %s149
      %p156 = scmp.eq.s32.totalorder %s31, 1
      %p157 = por %p155, %p156
      %p158 = scmp.ne.s32.totalorder %s149, %s150
      %p159 = scmp.eq.s32.totalorder %s31, 0
      %p160 = por %p158, %p159
      %p161 = scmp.ne.s32.totalorder %s149, %s150
      %p162 = scmp.eq.s32.totalorder %s32, 1
      %p163 = por %p161, %p162
      %p165 = scmp.ne.s32.totalorder %s150, %s164
      %p166 = scmp.eq.s32.totalorder %s32, 0
      %p167 = por %p165, %p166
      %s168 = ssub.s32 %s33, %s45
      %s169 = ssub.s32 %s34, %s41
      %s170 = sor.u32 %s168, %s169
      %p171 = scmp.eq.s32.totalorder %s170, 0
      %s173 = sadd.s32 %s172, 1
      %s174 = scalar_select %p171, %s172, %s173
      %p177 = pneg %p171
      %p178 = scmp.eq.s32.totalorder %s26, 1
      %p179 = por %p177, %p178
      %p180 = scmp.ne.s32.totalorder %s172, %s175
      %p181 = scmp.eq.s32.totalorder %s26, 0
      %p182 = por %p180, %p181
      %p183 = scmp.ne.s32.totalorder %s172, %s175
      %p184 = scmp.eq.s32.totalorder %s31, 1
      %p185 = por %p183, %p184
      %p186 = scmp.ne.s32.totalorder %s175, %s176
      %p187 = scmp.eq.s32.totalorder %s31, 0
      %p188 = por %p186, %p187
      %p189 = scmp.ne.s32.totalorder %s175, %s176
      %p190 = scmp.eq.s32.totalorder %s32, 1
      %p191 = por %p189, %p190
      %p193 = scmp.ne.s32.totalorder %s176, %s192
      %p194 = scmp.eq.s32.totalorder %s32, 0
      %p195 = por %p193, %p194
      %s196 = ssub.s32 %s33, %s45
      %s197 = ssub.s32 %s34, %s41
      %s198 = sor.u32 %s196, %s197
      %p199 = scmp.eq.s32.totalorder %s198, 0
      %s201 = sadd.s32 %s200, 1
      %s202 = scalar_select %p199, %s200, %s201
      %p205 = pneg %p199
      %p206 = scmp.eq.s32.totalorder %s26, 1
      %p207 = por %p205, %p206
      %p208 = scmp.ne.s32.totalorder %s200, %s203
      %p209 = scmp.eq.s32.totalorder %s26, 0
      %p210 = por %p208, %p209
      %p211 = scmp.ne.s32.totalorder %s200, %s203
      %p212 = scmp.eq.s32.totalorder %s31, 1
      %p213 = por %p211, %p212
      %p214 = scmp.ne.s32.totalorder %s203, %s204
      %p215 = scmp.eq.s32.totalorder %s31, 0
      %p216 = por %p214, %p215
      %p217 = scmp.ne.s32.totalorder %s203, %s204
      %p218 = scmp.eq.s32.totalorder %s32, 1
      %p219 = por %p217, %p218
      %p221 = scmp.ne.s32.totalorder %s204, %s220
      %p222 = scmp.eq.s32.totalorder %s32, 0
      %p223 = por %p221, %p222
      %p224 = scmp.le.s32.totalorder 1, %s26
      %p225 = scmp.lt.s32.totalorder %s26, 3
      %p226 = pnand %p224, %p225
      %p227 = pneg %p226
      // Predicated region
      $region9: #{tpu_custom_call.1} parent=5 // pred_check
        _
      $region10: #{tpu_custom_call.1} parent=5 // pred_check_branch
        %229 = sbr.rel (%p226) target = $region12
      $region11: #{tpu_custom_call.1} parent=5 // pred_region
        %s230 = ssub.s32 %s26, 1
        // Predicated region
        $region13: #{tpu_custom_call.1} parent=11 // pred_check
          %p231 = pneg %p139
        $region14: #{tpu_custom_call.1} parent=11 // pred_check_branch
          %233 = sbr.rel (%p231) target = $region16
        $region15: #{tpu_custom_call.1} parent=11 // pred_region
          %235 = vsyncadd [#allocation9], 0
          %s236 = sshll.u32 %s3, 4
          %s237 = int_to_ptr.hbm [resolvable:$true] %s236
          %s238 = sshll.u32 [#allocation8], 4
          %s239 = int_to_ptr.vmem [resolvable:$true] %s238
          %244 = dma.hbm_to_vmem [thread:$0]  %s237, 256, %s239, [#allocation9], 64, 64, 4
        $region16: #{tpu_custom_call.1} parent=11 // pred_fallthru
          _
        // Predicated region
        $region17: #{tpu_custom_call.1} parent=11 // pred_check
          %p245 = pneg %p160
        $region18: #{tpu_custom_call.1} parent=11 // pred_check_branch
          %247 = sbr.rel (%p245) target = $region20
        $region19: #{tpu_custom_call.1} parent=11 // pred_region
          _
        $region20: #{tpu_custom_call.1} parent=11 // pred_fallthru
          _
      $region12: #{tpu_custom_call.1} parent=5 // pred_fallthru
        _
      %p248 = scmp.lt.s32.totalorder %s26, 2
      // Predicated region
      $region21: #{tpu_custom_call.1} parent=5 // pred_check
        %p249 = pneg %p248
      $region22: #{tpu_custom_call.1} parent=5 // pred_check_branch
        %251 = sbr.rel (%p249) target = $region24
      $region23: #{tpu_custom_call.1} parent=5 // pred_region
        // Predicated region
        $region25: #{tpu_custom_call.1} parent=23 // pred_check
          %p252 = pneg %p60
        $region26: #{tpu_custom_call.1} parent=23 // pred_check_branch
          %254 = sbr.rel (%p252) target = $region28
        $region27: #{tpu_custom_call.1} parent=23 // pred_region
          %s255 = sand.u32 %s50, 1
          %s256 = scalar_lea.sflag [#allocation3], %s255
          %s257 = sand.u32 %s50, 1
          %s258 = smul.addr %s257, 4
          %s259 = scalar_lea.vmem [#allocation2], %s258
          %261 = vsyncadd %s256, 0
          %s262 = sadd.s32 %s34, %s33
          %s263 = smul.addr %s262, 4
          %s264 = scalar_lea.hbm %s0, %s263
          %s266 = sshll.u32 %s264, 4
          %s267 = int_to_ptr.hbm [resolvable:$true] %s266
          %s268 = sshll.u32 %s259, 4
          %s269 = int_to_ptr.vmem [resolvable:$true] %s268
          %271 = dma.hbm_to_vmem [thread:$0]  %s267, 64, %s269, %s256
        $region28: #{tpu_custom_call.1} parent=23 // pred_fallthru
          _
        // Predicated region
        $region29: #{tpu_custom_call.1} parent=23 // pred_check
          %p272 = pneg %p86
        $region30: #{tpu_custom_call.1} parent=23 // pred_check_branch
          %274 = sbr.rel (%p272) target = $region32
        $region31: #{tpu_custom_call.1} parent=23 // pred_region
          %s275 = sand.u32 %s26, 1
          %s276 = scalar_lea.sflag [#allocation6], %s275
          %s277 = sand.u32 %s76, 1
          %s278 = smul.addr %s277, 4
          %s279 = scalar_lea.vmem [#allocation5], %s278
          %281 = vsyncadd %s276, 0
          %s282 = smul.addr %s33, 4
          %s283 = scalar_lea.hbm %s1, %s282
          %s285 = sshll.u32 %s283, 4
          %s286 = int_to_ptr.hbm [resolvable:$true] %s285
          %s287 = sshll.u32 %s279, 4
          %s288 = int_to_ptr.vmem [resolvable:$true] %s287
          %290 = dma.hbm_to_vmem [thread:$0]  %s286, 64, %s288, %s276
        $region32: #{tpu_custom_call.1} parent=23 // pred_fallthru
          _
        // Predicated region
        $region33: #{tpu_custom_call.1} parent=23 // pred_check
          %p291 = pneg %p112
        $region34: #{tpu_custom_call.1} parent=23 // pred_check_branch
          %293 = sbr.rel (%p291) target = $region36
        $region35: #{tpu_custom_call.1} parent=23 // pred_region
          %s294 = sand.u32 %s26, 1
          %s295 = scalar_lea.sflag [#allocation6], %s294
          %s296 = sand.u32 %s102, 1
          %s297 = smul.addr %s296, 4
          %s298 = scalar_lea.vmem [#allocation7], %s297
          %300 = vsyncadd %s295, 0
          %s301 = smul.addr %s33, 4
          %s302 = scalar_lea.hbm %s2, %s301
          %s304 = sshll.u32 %s302, 4
          %s305 = int_to_ptr.hbm [resolvable:$true] %s304
          %s306 = sshll.u32 %s298, 4
          %s307 = int_to_ptr.vmem [resolvable:$true] %s306
          %309 = dma.hbm_to_vmem [thread:$0]  %s305, 64, %s307, %s295
        $region36: #{tpu_custom_call.1} parent=23 // pred_fallthru
          _
      $region24: #{tpu_custom_call.1} parent=5 // pred_fallthru
        _
      %p310 = scmp.le.s32.totalorder 1, %s26
      %p311 = scmp.lt.s32.totalorder %s26, 3
      %p312 = pnand %p310, %p311
      %p313 = pneg %p312
      // Predicated region
      $region37: #{tpu_custom_call.1} parent=5 // pred_check
        _
      $region38: #{tpu_custom_call.1} parent=5 // pred_check_branch
        %315 = sbr.rel (%p312) target = $region40
      $region39: #{tpu_custom_call.1} parent=5 // pred_region
        %s316 = ssub.s32 %s26, 1
        %s317 = sand.u32 %s53, 1
        %s318 = scalar_lea.sflag [#allocation3], %s317
        %s319 = sand.u32 %s53, 1
        %s320 = smul.addr %s319, 4
        %s321 = scalar_lea.vmem [#allocation2], %s320
        // Predicated region
        $region41: #{tpu_custom_call.1} parent=39 // pred_check
          %p322 = pneg %p66
        $region42: #{tpu_custom_call.1} parent=39 // pred_check_branch
          %324 = sbr.rel (%p322) target = $region44
        $region43: #{tpu_custom_call.1} parent=39 // pred_region
          %326 = dma.done %s318, 64
        $region44: #{tpu_custom_call.1} parent=39 // pred_fallthru
          _
        %s327 = sand.u32 %s31, 1
        %s328 = scalar_lea.sflag [#allocation6], %s327
        %s329 = sand.u32 %s79, 1
        %s330 = smul.addr %s329, 4
        %s331 = scalar_lea.vmem [#allocation5], %s330
        // Predicated region
        $region45: #{tpu_custom_call.1} parent=39 // pred_check
          %p332 = pneg %p92
        $region46: #{tpu_custom_call.1} parent=39 // pred_check_branch
          %334 = sbr.rel (%p332) target = $region48
        $region47: #{tpu_custom_call.1} parent=39 // pred_region
          %336 = dma.done %s328, 64
        $region48: #{tpu_custom_call.1} parent=39 // pred_fallthru
          _
        %s337 = sand.u32 %s31, 1
        %s338 = scalar_lea.sflag [#allocation6], %s337
        %s339 = sand.u32 %s105, 1
        %s340 = smul.addr %s339, 4
        %s341 = scalar_lea.vmem [#allocation7], %s340
        // Predicated region
        $region49: #{tpu_custom_call.1} parent=39 // pred_check
          %p342 = pneg %p118
        $region50: #{tpu_custom_call.1} parent=39 // pred_check_branch
          %344 = sbr.rel (%p342) target = $region52
        $region51: #{tpu_custom_call.1} parent=39 // pred_region
          %346 = dma.done %s338, 64
        $region52: #{tpu_custom_call.1} parent=39 // pred_fallthru
          _
        // Predicated region
        $region53: #{tpu_custom_call.1} parent=39 // pred_check
          %p347 = pneg %p139
        $region54: #{tpu_custom_call.1} parent=39 // pred_check_branch
          %349 = sbr.rel (%p347) target = $region56
        $region55: #{tpu_custom_call.1} parent=39 // pred_region
          %351 = dma.done [#allocation9], 256
        $region56: #{tpu_custom_call.1} parent=39 // pred_fallthru
          _
        %s352 = sand.u32 %s53, 1
        %s353 = scalar_lea.sflag [#allocation3], %s352
        %s354 = sand.u32 %s53, 1
        %s355 = smul.addr %s354, 4
        %s356 = scalar_lea.vmem [#allocation2], %s355
        %p357 = pneg %p66
        %p358 = pneg %p63
        %s359 = sand.u32 %s31, 1
        %s360 = scalar_lea.sflag [#allocation6], %s359
        %s361 = sand.u32 %s79, 1
        %s362 = smul.addr %s361, 4
        %s363 = scalar_lea.vmem [#allocation5], %s362
        %p364 = pneg %p92
        %p365 = pneg %p89
        %s366 = sand.u32 %s31, 1
        %s367 = scalar_lea.sflag [#allocation6], %s366
        %s368 = sand.u32 %s105, 1
        %s369 = smul.addr %s368, 4
        %s370 = scalar_lea.vmem [#allocation7], %s369
        %p371 = pneg %p118
        %p372 = pneg %p115
        %p373 = pneg %p139
        %p374 = pneg %p136
        %p375 = pneg %p160
        %p376 = pneg %p157
        %p377 = pneg %p188
        %p378 = pneg %p185
        %s379 = sand.u32 %s175, 1
        %s380 = scalar_lea.sflag [#allocation4], %s379
        %s381 = sand.u32 %s175, 1
        %s382 = smul.addr %s381, 8
        %s383 = scalar_lea.vmem [#allocation10], %s382
        %p384 = pneg %p216
        %p385 = pneg %p213
        %s386 = sand.u32 %s203, 1
        %s387 = scalar_lea.sflag [#allocation12], %s386
        %s388 = sand.u32 %s203, 1
        %s389 = smul.addr %s388, 8
        %s390 = scalar_lea.vmem [#allocation11], %s389
        %v392 = vld [vmem:[%s321] sm:$0xf]
        %v393 = vld [vmem:[#allocation8] sm:$0xf]
        %v394 = vld [vmem:[#allocation8 + $0x4] sm:$0xf]
        %v395 = vld [vmem:[#allocation8 + $0x8] sm:$0xf]
        %v396 = vld [vmem:[#allocation8 + $0xc] sm:$0xf]
        %v397 = vld [vmem:[%s4] sm:$0x1]
        %v399 = vperm.slane %v397, 0
        %v405 = vunpack.c.l.b16 %v393
        %v406 = vunpack.c.l.b16 %v394
        %v407 = vunpack.c.l.b16 %v395
        %v408 = vunpack.c.l.b16 %v396
        %v409 = vpack.c.b16 %v406, %v405
        %v410 = vpack.c.b16 %v408, %v407
        %vm413 = vcmask 261120
        %v415 = vsel %vm413, %v392, 0
        %417 = vmatpush.bf16.msra.mxu0 0
        %418 = vmatpush.bf16.msra.mxu0 0
        %419 = vmatpush.bf16.msra.mxu0 0
        %420 = vmatpush.bf16.msra.mxu0 0
        %421 = vmatpush.bf16.msra.mxu0 0
        %422 = vmatpush.bf16.msra.mxu0 0
        %423 = vmatpush.bf16.msra.mxu0 %v410
        %424 = vmatpush.bf16.msra.mxu0 %v409
        %425 = vmatmul.bf16.gmra.mxu0 %v415
        %v426 = vpop.f32.mrf.mxu0
        %v427 = vadd.f32 %v399, %v426
        %v428 = vpop.f32.mrf.mxu0
        %429 = vdwg.mxu0
        %v430 = vpack.c.bf16 %v427, %v427
        %v431 = vld [vmem:[%s331] sm:$0xf]
        %v433 = vsel %vm413, %v430, 0
        %v436 = vsel %vm413, %v431, 0
        %438 = vmatpush.bf16.xpose.msra.mxu0 0
        %439 = vmatpush.bf16.xpose.msra.mxu0 0
        %440 = vmatpush.bf16.xpose.msra.mxu0 0
        %441 = vmatpush.bf16.xpose.msra.mxu0 0
        %442 = vmatpush.bf16.xpose.msra.mxu0 0
        %443 = vmatpush.bf16.xpose.msra.mxu0 0
        %444 = vmatpush.bf16.xpose.msra.mxu0 0
        %445 = vmatpush.bf16.xpose.msra.mxu0 %v436
        %446 = vmatmul.bf16.gmra.mxu0 %v433
        %v447 = vpop.f32.mrf.mxu0
        %v448 = vadd.f32 0.0, %v447
        %v449 = vpop.f32.mrf.mxu0
        %450 = vdwg.mxu0
        %vm451 = vcmask 64512
        %452 = vst.msk [vmem:[%s390] sm:$0xff] %vm451, %v448
        %v453 = vsel %vm451, %v448, -inf
        %454 = vmax.xlane.f32.xlu0 %v453
        %v455 = vpop.xlane.xlu0 %454
        %v456 = vsub.f32 %v448, %v455
        %v457 = vmul.f32 %v456, 1.442695
        %v458 = vpow.pop %v457
        %v459 = vsel %vm451, %v458, 0.0
        %460 = vadd.xlane.f32.xlu0 %v459
        %v461 = vpop.xlane.xlu0 %460
        %v462 = vrcp.pop %v461
        %v463 = vmul.f32 %v458, %v462
        %v464 = vpack.c.bf16 %v463, %v463
        %v465 = vld [vmem:[%s341] sm:$0xf]
        %v467 = vsel %vm451, %v464, 0
        %vm469 = vcmask 1043456
        %v471 = vsel %vm469, %v465, 0
        %473 = vmatpush.bf16.msra.mxu0 0
        %474 = vmatpush.bf16.msra.mxu0 0
        %475 = vmatpush.bf16.msra.mxu0 0
        %476 = vmatpush.bf16.msra.mxu0 0
        %477 = vmatpush.bf16.msra.mxu0 0
        %478 = vmatpush.bf16.msra.mxu0 0
        %479 = vmatpush.bf16.msra.mxu0 0
        %480 = vmatpush.bf16.msra.mxu0 %v471
        %481 = vmatmul.bf16.gmra.mxu0 %v467
        %v482 = vpop.f32.mrf.mxu0
        %v483 = vadd.f32 0.0, %v482
        %v484 = vpop.f32.mrf.mxu0
        %485 = vdwg.mxu0
        %486 = vst.msk [vmem:[%s383] sm:$0xff] %vm413, %v483
        %s487 = sand.u32 %s175, 1
        %s488 = scalar_lea.sflag [#allocation4], %s487
        %s489 = sand.u32 %s175, 1
        %s490 = smul.addr %s489, 8
        %s491 = scalar_lea.vmem [#allocation10], %s490
        %s492 = sand.u32 %s203, 1
        %s493 = scalar_lea.sflag [#allocation12], %s492
        %s494 = sand.u32 %s203, 1
        %s495 = smul.addr %s494, 8
        %s496 = scalar_lea.vmem [#allocation11], %s495
        // Predicated region
        $region57: #{tpu_custom_call.1} parent=39 // pred_check
          %p497 = pneg %p185
        $region58: #{tpu_custom_call.1} parent=39 // pred_check_branch
          %499 = sbr.rel (%p497) target = $region60
        $region59: #{tpu_custom_call.1} parent=39 // pred_region
          %501 = vsyncadd %s488, 0
          %s502 = sadd.s32 %s36, %s35
          %s503 = smul.addr %s502, 8
          %s504 = scalar_lea.hbm %s5, %s503
          %s506 = sshll.u32 %s491, 4
          %s507 = int_to_ptr.vmem [resolvable:$true] %s506
          %s508 = sshll.u32 %s504, 4
          %s509 = int_to_ptr.hbm [resolvable:$true] %s508
          %511 = dma.vmem_to_hbm [thread:$0]  %s507, 128, %s509, %s488
        $region60: #{tpu_custom_call.1} parent=39 // pred_fallthru
          _
        // Predicated region
        $region61: #{tpu_custom_call.1} parent=39 // pred_check
          %p512 = pneg %p213
        $region62: #{tpu_custom_call.1} parent=39 // pred_check_branch
          %514 = sbr.rel (%p512) target = $region64
        $region63: #{tpu_custom_call.1} parent=39 // pred_region
          %516 = vsyncadd %s493, 0
          %s517 = sadd.s32 %s36, %s35
          %s518 = smul.addr %s517, 8
          %s519 = scalar_lea.hbm %s6, %s518
          %s521 = sshll.u32 %s496, 4
          %s522 = int_to_ptr.vmem [resolvable:$true] %s521
          %s523 = sshll.u32 %s519, 4
          %s524 = int_to_ptr.hbm [resolvable:$true] %s523
          %526 = dma.vmem_to_hbm [thread:$0]  %s522, 128, %s524, %s493
        $region64: #{tpu_custom_call.1} parent=39 // pred_fallthru
          _
      $region40: #{tpu_custom_call.1} parent=5 // pred_fallthru
        _
      %p527 = scmp.le.s32.totalorder 2, %s26
      // Predicated region
      $region65: #{tpu_custom_call.1} parent=5 // pred_check
        %p528 = pneg %p527
      $region66: #{tpu_custom_call.1} parent=5 // pred_check_branch
        %530 = sbr.rel (%p528) target = $region68
      $region67: #{tpu_custom_call.1} parent=5 // pred_region
        %s531 = ssub.s32 %s26, 2
        // Predicated region
        $region69: #{tpu_custom_call.1} parent=67 // pred_check
          %p532 = pneg %p191
        $region70: #{tpu_custom_call.1} parent=67 // pred_check_branch
          %534 = sbr.rel (%p532) target = $region72
        $region71: #{tpu_custom_call.1} parent=67 // pred_region
          %s535 = sand.u32 %s176, 1
          %s536 = scalar_lea.sflag [#allocation4], %s535
          %s537 = sand.u32 %s176, 1
          %s538 = smul.addr %s537, 8
          %s539 = scalar_lea.vmem [#allocation10], %s538
          %541 = dma.done %s536, 128
        $region72: #{tpu_custom_call.1} parent=67 // pred_fallthru
          _
        // Predicated region
        $region73: #{tpu_custom_call.1} parent=67 // pred_check
          %p542 = pneg %p219
        $region74: #{tpu_custom_call.1} parent=67 // pred_check_branch
          %544 = sbr.rel (%p542) target = $region76
        $region75: #{tpu_custom_call.1} parent=67 // pred_region
          %s545 = sand.u32 %s204, 1
          %s546 = scalar_lea.sflag [#allocation12], %s545
          %s547 = sand.u32 %s204, 1
          %s548 = smul.addr %s547, 8
          %s549 = scalar_lea.vmem [#allocation11], %s548
          %551 = dma.done %s546, 128
        $region76: #{tpu_custom_call.1} parent=67 // pred_fallthru
          _
      $region68: #{tpu_custom_call.1} parent=5 // pred_fallthru
        _
    $region6: #{tpu_custom_call.1} parent=1 // loop_footer
      %s30 = sadd.s32 1, %s26
    $region7: #{tpu_custom_call.1} parent=1 // loop_footer_branch
      %25 = sbr.rel target = $region3
    $region8: #{tpu_custom_call.1} parent=1 // loop_exit
      _
    %552 = vsyncpa [#allocation3], 1
    %s553 = scalar_lea.sflag [#allocation3], 1
    %554 = vsyncpa %s553, 1
    %555 = vsyncpa [#allocation6], 1
    %s556 = scalar_lea.sflag [#allocation6], 1
    %557 = vsyncpa %s556, 1
    %558 = vsyncpa [#allocation9], 1
    %559 = vsyncpa [#allocation4], 1
    %s560 = scalar_lea.sflag [#allocation4], 1
    %561 = vsyncpa %s560, 1
    %562 = vsyncpa [#allocation12], 1
    %s563 = scalar_lea.sflag [#allocation12], 1
    %564 = vsyncpa %s563, 1

</llo_original>
